<compile_context>
chip_gen: v7x
topology: tpu7x:2x2x1
jax: 0.10.0
libtpu: 0.0.40
codegen_flags: <defaults>
</compile_context>

<pallas_src>
import math

import jax
import jax.numpy as jnp
from jax.experimental import pallas as pl
from jax.experimental.pallas import tpu as pltpu


def _token_embedding_kernel(x_ref, w_ref, o_ref):
    """Bias-free circular Conv1d(k=3) as a single im2col matmul.

    x_ref: (Bt, L, c_in)       input block, channels-last
    w_ref: (3*c_in, d_model)   folded conv taps [W0^T ; W1^T ; W2^T]
    o_ref: (Bt, L, d_model)
    """
    bt, L, c = x_ref.shape
    d_model = o_ref.shape[-1]

    x = x_ref[...]                                                    # (Bt, L, c)

    # Circular wrap built in-kernel (cheap sublane shifts; no host padded copy).
    # x_prev[t] = x[t-1],  x_next[t] = x[t+1]   (wrap within each batch element)
    x_prev = jnp.concatenate([x[:, L - 1:, :], x[:, :L - 1, :]], axis=1)
    x_next = jnp.concatenate([x[:, 1:, :], x[:, :1, :]], axis=1)

    # im2col tile: column block k corresponds to conv tap k.
    xc = jnp.concatenate([x_prev, x, x_next], axis=-1)                # (Bt, L, 3c)
    xc = xc.reshape(bt * L, 3 * c)                                    # (Bt*L, 3c)

    # One MXU matmul, f32 accumulation, single cast at the store.
    y = jnp.dot(
        xc,
        w_ref[...],
        preferred_element_type=jnp.float32,
        precision=jax.lax.Precision.HIGHEST,  # f32-faithful vs PyTorch f32 conv
    )                                                                 # (Bt*L, d)
    o_ref[...] = y.reshape(bt, L, d_model).astype(o_ref.dtype)


def _pick_batch_tile(B, L, c_in, d_model, *, bytes_per_elem=4,
                     target_rows=512, vmem_budget_bytes=8 * 1024 * 1024):
    """Batch elements per grid step: big enough to amortize per-step overhead
    (aim for Bt*L >= ~512 rows), small enough that double-buffered in+out blocks
    stay well inside VMEM (conservative vs. v7x's 64 MiB physical VMEM)."""
    bt = max(1, min(B, max(1, target_rows // max(L, 1))))
    per_batch_bytes = L * (c_in + d_model) * bytes_per_elem * 2  # 2x: double buffer
    bt = max(1, min(bt, max(1, vmem_budget_bytes // max(per_batch_bytes, 1))))
    bt = min(bt, B)
    while B % bt:  # blocks must tile the batch evenly
        bt -= 1
    return bt


def token_embedding(x, w_cat):
    """x: (B, L, c_in); w_cat: (3*c_in, d_model) folded conv weight -> (B, L, d_model)."""
    B, L, c_in = x.shape
    d_model = w_cat.shape[-1]
    bt = _pick_batch_tile(B, L, c_in, d_model)
    grid = (B // bt,)

    return pl.pallas_call(
        _token_embedding_kernel,
        out_shape=jax.ShapeDtypeStruct((B, L, d_model), x.dtype),
        grid_spec=pltpu.PrefetchScalarGridSpec(
            num_scalar_prefetch=0,
            grid=grid,
            in_specs=[
                pl.BlockSpec((bt, L, c_in), lambda b: (b, 0, 0)),
                # constant block index -> weight stays resident, DMA'd once
                pl.BlockSpec((3 * c_in, d_model), lambda b: (0, 0)),
            ],
            out_specs=pl.BlockSpec((bt, L, d_model), lambda b: (b, 0, 0)),
        ),
        compiler_params=pltpu.CompilerParams(
            dimension_semantics=("parallel",),  # disjoint output blocks -> 2-TC on v7x
        ),
    )(x, w_cat)


def make_conv_weight(c_in, d_model, key):
    """PyTorch Conv1d weight (d_model, c_in, 3) with kaiming_normal_(fan_in, leaky_relu)."""
    fan_in = c_in * 3
    gain = math.sqrt(2.0)  # calculate_gain('leaky_relu', a=0)
    std = gain / math.sqrt(fan_in)
    return jax.random.normal(key, (d_model, c_in, 3), dtype=jnp.float32) * std


def fold_conv_weight(w_torch):
    """(d_model, c_in, 3) -> (3*c_in, d_model): rows [W0^T ; W1^T ; W2^T]."""
    d_model, c_in, k = w_torch.shape
    return jnp.transpose(w_torch, (2, 1, 0)).reshape(k * c_in, d_model)


def token_embedding_ref(x, w_torch):
    """Independent pure-JAX reference: circular-padded cross-correlation (as PyTorch)."""
    x_ncl = jnp.transpose(x, (0, 2, 1))                               # (B, c_in, L)
    x_pad = jnp.concatenate([x_ncl[:, :, -1:], x_ncl, x_ncl[:, :, :1]], axis=-1)
    y = jax.lax.conv_general_dilated(
        x_pad, w_torch, window_strides=(1,), padding="VALID",
        dimension_numbers=("NCH", "OIH", "NCH"),
        precision=jax.lax.Precision.HIGHEST)
    return jnp.transpose(y, (0, 2, 1))                                # (B, L, d_model)


if __name__ == "__main__":
    B, L, c_in, d_model = 2, 8, 4, 32
    key = jax.random.PRNGKey(0)
    kx, kw = jax.random.split(key)
    x = jax.random.normal(kx, (B, L, c_in), dtype=jnp.float32)
    w_torch = make_conv_weight(c_in, d_model, kw)
    w_cat = fold_conv_weight(w_torch)

    out = token_embedding(x, w_cat)
    jax.block_until_ready(out)
    assert out.shape == (B, L, d_model), out.shape

    ref = token_embedding_ref(x, w_torch)
    max_err = float(jnp.max(jnp.abs(out - ref)))
    assert jnp.allclose(out, ref, atol=1e-3, rtol=1e-3), max_err

    print("KERNEL_OK")
</pallas_src>

<mosaic_0001>
module attributes {stable_mosaic.version = 11 : i64} {
  func.func @_token_embedding_kernel(%arg0: i32, %arg1: memref<2x8x4xf32, #tpu.memory_space<vmem>>, %arg2: memref<12x32xf32, #tpu.memory_space<vmem>>, %arg3: memref<2x8x32xf32, #tpu.memory_space<vmem>>) attributes {dimension_semantics = [#tpu.dimension_semantics<parallel>], iteration_bounds = array<i64: 1>, scalar_prefetch = 0 : i64, scratch_operands = 0 : i64, tpu.core_type = #tpu.core_type<tc>, window_params = [{transform_indices = @transform_0, window_bounds = array<i64: 2, 8, 4>}, {pipeline_mode = #tpu.pipeline_mode<synchronous>, transform_indices = @transform_1, window_bounds = array<i64: 12, 32>}, {transform_indices = @transform_2, window_bounds = array<i64: 2, 8, 32>}]} {
    %c0 = arith.constant 0 : index
    %c0_0 = arith.constant 0 : index
    %c0_1 = arith.constant 0 : index
    %0 = vector.load %arg1[%c0, %c0_0, %c0_1] : memref<2x8x4xf32, #tpu.memory_space<vmem>>, vector<2x8x4xf32>
    %1 = vector.extract_strided_slice %0 {offsets = [0, 7, 0], sizes = [2, 1, 4], strides = [1, 1, 1]} : vector<2x8x4xf32> to vector<2x1x4xf32>
    %2 = vector.extract_strided_slice %0 {offsets = [0, 0, 0], sizes = [2, 7, 4], strides = [1, 1, 1]} : vector<2x8x4xf32> to vector<2x7x4xf32>
    %3 = tpu.concatenate %1, %2 in 1 : vector<2x1x4xf32>, vector<2x7x4xf32> -> vector<2x8x4xf32>
    %4 = vector.extract_strided_slice %0 {offsets = [0, 1, 0], sizes = [2, 7, 4], strides = [1, 1, 1]} : vector<2x8x4xf32> to vector<2x7x4xf32>
    %5 = vector.extract_strided_slice %0 {offsets = [0, 0, 0], sizes = [2, 1, 4], strides = [1, 1, 1]} : vector<2x8x4xf32> to vector<2x1x4xf32>
    %6 = tpu.concatenate %4, %5 in 1 : vector<2x7x4xf32>, vector<2x1x4xf32> -> vector<2x8x4xf32>
    %7 = tpu.concatenate %3, %0, %6 in 2 : vector<2x8x4xf32>, vector<2x8x4xf32>, vector<2x8x4xf32> -> vector<2x8x12xf32>
    %8 = vector.shape_cast %7 : vector<2x8x12xf32> to vector<16x12xf32>
    %c0_2 = arith.constant 0 : index
    %c0_3 = arith.constant 0 : index
    %9 = vector.load %arg2[%c0_2, %c0_3] : memref<12x32xf32, #tpu.memory_space<vmem>>, vector<12x32xf32>
    %cst = arith.constant dense<0.000000e+00> : vector<16x32xf32>
    %10 = tpu.matmul %8, %9, %cst {dimension_numbers = #tpu.dot_dimension_numbers<[1], [0], [0], [1], [0, 0, 1, 1], [], []>, precision = #tpu.contract_precision<fp32>} : vector<16x12xf32>, vector<12x32xf32>, vector<16x32xf32> -> vector<16x32xf32>
    %11 = vector.shape_cast %10 : vector<16x32xf32> to vector<2x8x32xf32>
    %c0_4 = arith.constant 0 : index
    %c0_5 = arith.constant 0 : index
    %c0_6 = arith.constant 0 : index
    %12 = vector.load %arg3[%c0_4, %c0_5, %c0_6] : memref<2x8x32xf32, #tpu.memory_space<vmem>>, vector<2x8x32xf32>
    tpu.vector_store %arg3[%c0_4, %c0_5, %c0_6], %11 {strides = array<i32>} : memref<2x8x32xf32, #tpu.memory_space<vmem>>, vector<2x8x32xf32>,
    return
  }
  func.func @transform_0(%arg0: i32) -> (i32, i32, i32) {
    %c0_i32 = arith.constant 0 : i32
    %c0_i32_0 = arith.constant 0 : i32
    %c0_i32_1 = arith.constant 0 : i32
    return %arg0, %c0_i32, %c0_i32_0 : i32, i32, i32
  }
  func.func @transform_1(%arg0: i32) -> (i32, i32) {
    %c0_i32 = arith.constant 0 : i32
    %c0_i32_0 = arith.constant 0 : i32
    %c0_i32_1 = arith.constant 0 : i32
    return %c0_i32, %c0_i32_0 : i32, i32
  }
  func.func @transform_2(%arg0: i32) -> (i32, i32, i32) {
    %c0_i32 = arith.constant 0 : i32
    %c0_i32_0 = arith.constant 0 : i32
    %c0_i32_1 = arith.constant 0 : i32
    return %arg0, %c0_i32, %c0_i32_0 : i32, i32, i32
  }
}

</mosaic_0001>

<llo_original>
// kernel: tpu_custom_call.1
$region0: #{tpu_custom_call.1}
  #allocation0 [shape = 'u32[]', space=smem, size = 0x4, offset = 0x4, fixed_abs, tag = 'smem constant byte address 0x4 - core index']
  #allocation1 [shape = 'u32[144,128]{1,0:T(1,128)}', space=vmem, size = 0x12000, scoped, tag = 'internal scratch']
  %s0 = inlined_call_operand.vmem [shape: f32[2,8,4], index: 0, kind: input, shape index: {}]
  %s1 = inlined_call_operand.vmem [shape: f32[12,32], index: 1, kind: input, shape index: {}]
  %s2 = inlined_call_operand.hbm [shape: f32[2,8,32], index: 2, kind: output, shape index: {}]
  %s3 = sld [smem:[#allocation0]]
  $region18: #{tpu_custom_call.1} parent=0
    _
  %s5 = ssub.s32 1, %s3
  %s6 = scalar_select 0, %s5, %s3
  $region1: #{tpu_custom_call.1} parent=0
    #allocation2 [shape = 'u8[8192]{0}', space=vmem, size = 0x2000, scoped, tag = 'output window, operand 0, single buffered']
    #allocation3 [shape = 's32[1]{0}', space=sflag, size = 0x4, scoped, tag = 'scoped memory for tpu_custom_call.1']
    %7 = vsyncpa [#allocation3], 0
    // Predicated region
    $region2: #{tpu_custom_call.1} parent=1 // pred_check
      _
    $region3: #{tpu_custom_call.1} parent=1 // pred_check_branch
      %9 = sbr.rel (0) target = $region5
    $region4: #{tpu_custom_call.1} parent=1 // pred_region
      _
    $region5: #{tpu_custom_call.1} parent=1 // pred_fallthru
      _
    // Predicated region
    $region6: #{tpu_custom_call.1} parent=1 // pred_check
      _
    $region7: #{tpu_custom_call.1} parent=1 // pred_check_branch
      %11 = sbr.rel (0) target = $region9
    $region8: #{tpu_custom_call.1} parent=1 // pred_region
      _
    $region9: #{tpu_custom_call.1} parent=1 // pred_fallthru
      _
    %v12 = vld [vmem:[%s0] sm:$0xff]
    %v13 = vld [vmem:[%s0 + $0x8] sm:$0xff]
    %v16 = vrot.slane %v12, 7
    %v17 = vrot.slane %v13, 7
    %vm20 = vcmask 1040384
    %v21 = vsel %vm20, %v16, %v16
    %v22 = vsel %vm20, %v17, %v17
    %v23 = vrot.slane %v12, 1
    %v24 = vrot.slane %v13, 1
    %vm27 = vcmask 1046528
    %v28 = vsel %vm27, %v23, %v23
    %v29 = vsel %vm27, %v24, %v24
    %30 = vrot.lane.b32.xlu0 %v12, 4
    %v31 = vpop.permute.xlu0 %30
    %32 = vrot.lane.b32.xlu0 %v13, 4
    %v33 = vpop.permute.xlu0 %32
    %38 = vrot.lane.b32.xlu0 %v28, 8
    %v39 = vpop.permute.xlu0 %38
    %40 = vrot.lane.b32.xlu0 %v29, 8
    %v41 = vpop.permute.xlu0 %40
    %vm44 = vcmask 31744
    %v45 = vsel %vm44, %v21, %v31
    %v46 = vsel %vm44, %v22, %v33
    %vm47 = vcmask 64512
    %v48 = vsel %vm47, %v45, %v39
    %v49 = vsel %vm47, %v46, %v41
    %v50 = vld [vmem:[%s1] sm:$0xff]
    %v51 = vld [vmem:[%s1 + $0x8] sm:$0xf]
    %vm52 = vcmask 97280
    %v54 = vsel %vm52, %v48, 0
    %v57 = vsel %vm52, %v49, 0
    %vm59 = vcmask 1043456
    %v61 = vsel %vm59, %v51, 0
    %63 = vmatprep.subr.mxu0 0.0
    %v64 = vand.u32 %v50, 4294901760
    %65 = vmatpush1.msra.mxu0 %v64
    %66 = vmatprep.subr.mxu0 0.0
    %v67 = vand.u32 %v61, 4294901760
    %68 = vmatpush1.msra.mxu0 %v67
    %69 = vmatprep.subr.mxu0 0.0
    %70 = vmatpush1.msra.mxu0 0.0
    %71 = vmatprep.subr.mxu0 0.0
    %72 = vmatpush1.msra.mxu0 0.0
    %73 = vmatprep.subr.mxu0 0.0
    %74 = vmatpush1.msra.mxu0 0.0
    %75 = vmatprep.subr.mxu0 0.0
    %76 = vmatpush1.msra.mxu0 0.0
    %77 = vmatprep.subr.mxu0 0.0
    %78 = vmatpush1.msra.mxu0 0.0
    %79 = vmatprep.subr.mxu0 0.0
    %80 = vmatpush1.msra.mxu0 0.0
    %81 = vmatprep.subr.mxu0 0.0
    %82 = vmatpush1.msra.mxu0 0.0
    %83 = vmatprep.subr.mxu0 0.0
    %84 = vmatpush1.msra.mxu0 0.0
    %85 = vmatprep.subr.mxu0 0.0
    %86 = vmatpush1.msra.mxu0 0.0
    %87 = vmatprep.subr.mxu0 0.0
    %88 = vmatpush1.msra.mxu0 0.0
    %89 = vmatprep.subr.mxu0 0.0
    %90 = vmatpush1.msra.mxu0 0.0
    %91 = vmatprep.subr.mxu0 0.0
    %92 = vmatpush1.msra.mxu0 0.0
    %93 = vmatprep.subr.mxu0 0.0
    %94 = vmatpush1.msra.mxu0 0.0
    %95 = vmatprep.subr.mxu0 0.0
    %96 = vmatpush1.msra.mxu0 0.0
    %97 = vmatprep.subr.mxu0 0.0
    %98 = vmatpush1.msra.mxu0 0.0
    %99 = vmatprep.subr.mxu0 0.0
    %100 = vmatpush1.msra.mxu0 0.0
    %101 = vmatprep.subr.mxu0 0.0
    %102 = vmatpush1.msra.mxu0 0.0
    %103 = vmatprep.subr.mxu0 0.0
    %104 = vmatpush1.msra.mxu0 0.0
    %105 = vmatprep.subr.mxu0 0.0
    %106 = vmatpush1.msra.mxu0 0.0
    %107 = vmatprep.subr.mxu0 0.0
    %108 = vmatpush1.msra.mxu0 0.0
    %109 = vmatprep.subr.mxu0 0.0
    %110 = vmatpush1.msra.mxu0 0.0
    %111 = vmatprep.subr.mxu0 0.0
    %112 = vmatpush1.msra.mxu0 0.0
    %113 = vmatprep.subr.mxu0 0.0
    %114 = vmatpush1.msra.mxu0 0.0
    %115 = vmatprep.subr.mxu0 0.0
    %116 = vmatpush1.msra.mxu0 0.0
    %117 = vmatprep.subr.mxu0 0.0
    %118 = vmatpush1.msra.mxu0 0.0
    %119 = vmatprep.subr.mxu0 0.0
    %120 = vmatpush1.msra.mxu0 0.0
    %121 = vmatprep.subr.mxu0 0.0
    %122 = vmatpush1.msra.mxu0 0.0
    %123 = vmatprep.subr.mxu0 0.0
    %124 = vmatpush1.msra.mxu0 0.0
    %125 = vmatprep.subr.mxu0 0.0
    %126 = vmatpush1.msra.mxu0 0.0
    %127 = vmatprep.subr.mxu0 0.0
    %128 = vmatpush1.msra.mxu0 0.0
    %129 = vmatprep.mubr.f32.mxu0 0.0
    %v130 = vand.u32 %v54, 4294901760
    %v131 = vsub.f32 %v54, %v130
    %v132 = vand.u32 %v131, 4294901760
    %v133 = vsub.f32 %v131, %v132
    %v134 = vand.u32 %v133, 4294901760
    %135 = vmatmul.mubr.f32.gmra.mrb[0].mxu0 %v134
    %v136 = vpop.f32.mrb[0].mxu0
    %v137 = vadd.f32 0.0, %v136
    %v138 = vpop.f32.mrb[0].mxu0
    %139 = vmatprep.mubr.f32.mxu0 0.0
    %v140 = vand.u32 %v57, 4294901760
    %v141 = vsub.f32 %v57, %v140
    %v142 = vand.u32 %v141, 4294901760
    %v143 = vsub.f32 %v141, %v142
    %v144 = vand.u32 %v143, 4294901760
    %145 = vmatmul.mubr.f32.gmra.mrb[0].mxu0 %v144
    %v146 = vpop.f32.mrb[0].mxu0
    %v147 = vadd.f32 0.0, %v146
    %v148 = vpop.f32.mrb[0].mxu0
    %149 = vdwg.mxu0
    %150 = vmatprep.subr.mxu0 0.0
    %v151 = vand.u32 %v50, 4294901760
    %v152 = vsub.f32 %v50, %v151
    %v153 = vand.u32 %v152, 4294901760
    %v154 = vsub.f32 %v152, %v153
    %v155 = vand.u32 %v154, 4294901760
    %156 = vmatpush1.msra.mxu0 %v155
    %157 = vmatprep.subr.mxu0 0.0
    %v158 = vand.u32 %v61, 4294901760
    %v159 = vsub.f32 %v61, %v158
    %v160 = vand.u32 %v159, 4294901760
    %v161 = vsub.f32 %v159, %v160
    %v162 = vand.u32 %v161, 4294901760
    %163 = vmatpush1.msra.mxu0 %v162
    %164 = vmatprep.subr.mxu0 0.0
    %165 = vmatpush1.msra.mxu0 0.0
    %166 = vmatprep.subr.mxu0 0.0
    %167 = vmatpush1.msra.mxu0 0.0
    %168 = vmatprep.subr.mxu0 0.0
    %169 = vmatpush1.msra.mxu0 0.0
    %170 = vmatprep.subr.mxu0 0.0
    %171 = vmatpush1.msra.mxu0 0.0
    %172 = vmatprep.subr.mxu0 0.0
    %173 = vmatpush1.msra.mxu0 0.0
    %174 = vmatprep.subr.mxu0 0.0
    %175 = vmatpush1.msra.mxu0 0.0
    %176 = vmatprep.subr.mxu0 0.0
    %177 = vmatpush1.msra.mxu0 0.0
    %178 = vmatprep.subr.mxu0 0.0
    %179 = vmatpush1.msra.mxu0 0.0
    %180 = vmatprep.subr.mxu0 0.0
    %181 = vmatpush1.msra.mxu0 0.0
    %182 = vmatprep.subr.mxu0 0.0
    %183 = vmatpush1.msra.mxu0 0.0
    %184 = vmatprep.subr.mxu0 0.0
    %185 = vmatpush1.msra.mxu0 0.0
    %186 = vmatprep.subr.mxu0 0.0
    %187 = vmatpush1.msra.mxu0 0.0
    %188 = vmatprep.subr.mxu0 0.0
    %189 = vmatpush1.msra.mxu0 0.0
    %190 = vmatprep.subr.mxu0 0.0
    %191 = vmatpush1.msra.mxu0 0.0
    %192 = vmatprep.subr.mxu0 0.0
    %193 = vmatpush1.msra.mxu0 0.0
    %194 = vmatprep.subr.mxu0 0.0
    %195 = vmatpush1.msra.mxu0 0.0
    %196 = vmatprep.subr.mxu0 0.0
    %197 = vmatpush1.msra.mxu0 0.0
    %198 = vmatprep.subr.mxu0 0.0
    %199 = vmatpush1.msra.mxu0 0.0
    %200 = vmatprep.subr.mxu0 0.0
    %201 = vmatpush1.msra.mxu0 0.0
    %202 = vmatprep.subr.mxu0 0.0
    %203 = vmatpush1.msra.mxu0 0.0
    %204 = vmatprep.subr.mxu0 0.0
    %205 = vmatpush1.msra.mxu0 0.0
    %206 = vmatprep.subr.mxu0 0.0
    %207 = vmatpush1.msra.mxu0 0.0
    %208 = vmatprep.subr.mxu0 0.0
    %209 = vmatpush1.msra.mxu0 0.0
    %210 = vmatprep.subr.mxu0 0.0
    %211 = vmatpush1.msra.mxu0 0.0
    %212 = vmatprep.subr.mxu0 0.0
    %213 = vmatpush1.msra.mxu0 0.0
    %214 = vmatprep.subr.mxu0 0.0
    %215 = vmatpush1.msra.mxu0 0.0
    %216 = vmatprep.subr.mxu0 0.0
    %217 = vmatpush1.msra.mxu0 0.0
    %218 = vmatprep.subr.mxu0 0.0
    %219 = vmatpush1.msra.mxu0 0.0
    %220 = vmatprep.subr.mxu0 0.0
    %221 = vmatpush1.msra.mxu0 0.0
    %222 = vmatprep.subr.mxu0 0.0
    %223 = vmatpush1.msra.mxu0 0.0
    %224 = vmatprep.mubr.f32.mxu0 0.0
    %v225 = vand.u32 %v54, 4294901760
    %226 = vmatmul.mubr.f32.gmra.mrb[0].mxu0 %v225
    %v227 = vpop.f32.mrb[0].mxu0
    %v228 = vadd.f32 %v137, %v227
    %v229 = vpop.f32.mrb[0].mxu0
    %230 = vmatprep.mubr.f32.mxu0 0.0
    %v231 = vand.u32 %v57, 4294901760
    %232 = vmatmul.mubr.f32.gmra.mrb[0].mxu0 %v231
    %v233 = vpop.f32.mrb[0].mxu0
    %v234 = vadd.f32 %v147, %v233
    %v235 = vpop.f32.mrb[0].mxu0
    %236 = vdwg.mxu0
    %237 = vmatprep.subr.mxu0 0.0
    %v238 = vand.u32 %v50, 4294901760
    %v239 = vsub.f32 %v50, %v238
    %240 = vmatpush1.msra.mxu0 %v239
    %241 = vmatprep.subr.mxu0 0.0
    %v242 = vand.u32 %v61, 4294901760
    %v243 = vsub.f32 %v61, %v242
    %244 = vmatpush1.msra.mxu0 %v243
    %245 = vmatprep.subr.mxu0 0.0
    %246 = vmatpush1.msra.mxu0 0.0
    %247 = vmatprep.subr.mxu0 0.0
    %248 = vmatpush1.msra.mxu0 0.0
    %249 = vmatprep.subr.mxu0 0.0
    %250 = vmatpush1.msra.mxu0 0.0
    %251 = vmatprep.subr.mxu0 0.0
    %252 = vmatpush1.msra.mxu0 0.0
    %253 = vmatprep.subr.mxu0 0.0
    %254 = vmatpush1.msra.mxu0 0.0
    %255 = vmatprep.subr.mxu0 0.0
    %256 = vmatpush1.msra.mxu0 0.0
    %257 = vmatprep.subr.mxu0 0.0
    %258 = vmatpush1.msra.mxu0 0.0
    %259 = vmatprep.subr.mxu0 0.0
    %260 = vmatpush1.msra.mxu0 0.0
    %261 = vmatprep.subr.mxu0 0.0
    %262 = vmatpush1.msra.mxu0 0.0
    %263 = vmatprep.subr.mxu0 0.0
    %264 = vmatpush1.msra.mxu0 0.0
    %265 = vmatprep.subr.mxu0 0.0
    %266 = vmatpush1.msra.mxu0 0.0
    %267 = vmatprep.subr.mxu0 0.0
    %268 = vmatpush1.msra.mxu0 0.0
    %269 = vmatprep.subr.mxu0 0.0
    %270 = vmatpush1.msra.mxu0 0.0
    %271 = vmatprep.subr.mxu0 0.0
    %272 = vmatpush1.msra.mxu0 0.0
    %273 = vmatprep.subr.mxu0 0.0
    %274 = vmatpush1.msra.mxu0 0.0
    %275 = vmatprep.subr.mxu0 0.0
    %276 = vmatpush1.msra.mxu0 0.0
    %277 = vmatprep.subr.mxu0 0.0
    %278 = vmatpush1.msra.mxu0 0.0
    %279 = vmatprep.subr.mxu0 0.0
    %280 = vmatpush1.msra.mxu0 0.0
    %281 = vmatprep.subr.mxu0 0.0
    %282 = vmatpush1.msra.mxu0 0.0
    %283 = vmatprep.subr.mxu0 0.0
    %284 = vmatpush1.msra.mxu0 0.0
    %285 = vmatprep.subr.mxu0 0.0
    %286 = vmatpush1.msra.mxu0 0.0
    %287 = vmatprep.subr.mxu0 0.0
    %288 = vmatpush1.msra.mxu0 0.0
    %289 = vmatprep.subr.mxu0 0.0
    %290 = vmatpush1.msra.mxu0 0.0
    %291 = vmatprep.subr.mxu0 0.0
    %292 = vmatpush1.msra.mxu0 0.0
    %293 = vmatprep.subr.mxu0 0.0
    %294 = vmatpush1.msra.mxu0 0.0
    %295 = vmatprep.subr.mxu0 0.0
    %296 = vmatpush1.msra.mxu0 0.0
    %297 = vmatprep.subr.mxu0 0.0
    %298 = vmatpush1.msra.mxu0 0.0
    %299 = vmatprep.subr.mxu0 0.0
    %300 = vmatpush1.msra.mxu0 0.0
    %301 = vmatprep.subr.mxu0 0.0
    %302 = vmatpush1.msra.mxu0 0.0
    %303 = vmatprep.subr.mxu0 0.0
    %304 = vmatpush1.msra.mxu0 0.0
    %305 = vmatprep.mubr.f32.mxu0 0.0
    %v306 = vand.u32 %v54, 4294901760
    %v307 = vsub.f32 %v54, %v306
    %308 = vmatmul.mubr.f32.gmra.mrb[0].mxu0 %v307
    %v309 = vpop.f32.mrb[0].mxu0
    %v310 = vadd.f32 %v228, %v309
    %v311 = vpop.f32.mrb[0].mxu0
    %312 = vmatprep.mubr.f32.mxu0 0.0
    %v313 = vand.u32 %v57, 4294901760
    %v314 = vsub.f32 %v57, %v313
    %315 = vmatmul.mubr.f32.gmra.mrb[0].mxu0 %v314
    %v316 = vpop.f32.mrb[0].mxu0
    %v317 = vadd.f32 %v234, %v316
    %v318 = vpop.f32.mrb[0].mxu0
    %319 = vdwg.mxu0
    %320 = vmatprep.subr.mxu0 0.0
    %v321 = vand.u32 %v50, 4294901760
    %322 = vmatpush1.msra.mxu0 %v321
    %323 = vmatprep.subr.mxu0 0.0
    %v324 = vand.u32 %v61, 4294901760
    %325 = vmatpush1.msra.mxu0 %v324
    %326 = vmatprep.subr.mxu0 0.0
    %327 = vmatpush1.msra.mxu0 0.0
    %328 = vmatprep.subr.mxu0 0.0
    %329 = vmatpush1.msra.mxu0 0.0
    %330 = vmatprep.subr.mxu0 0.0
    %331 = vmatpush1.msra.mxu0 0.0
    %332 = vmatprep.subr.mxu0 0.0
    %333 = vmatpush1.msra.mxu0 0.0
    %334 = vmatprep.subr.mxu0 0.0
    %335 = vmatpush1.msra.mxu0 0.0
    %336 = vmatprep.subr.mxu0 0.0
    %337 = vmatpush1.msra.mxu0 0.0
    %338 = vmatprep.subr.mxu0 0.0
    %339 = vmatpush1.msra.mxu0 0.0
    %340 = vmatprep.subr.mxu0 0.0
    %341 = vmatpush1.msra.mxu0 0.0
    %342 = vmatprep.subr.mxu0 0.0
    %343 = vmatpush1.msra.mxu0 0.0
    %344 = vmatprep.subr.mxu0 0.0
    %345 = vmatpush1.msra.mxu0 0.0
    %346 = vmatprep.subr.mxu0 0.0
    %347 = vmatpush1.msra.mxu0 0.0
    %348 = vmatprep.subr.mxu0 0.0
    %349 = vmatpush1.msra.mxu0 0.0
    %350 = vmatprep.subr.mxu0 0.0
    %351 = vmatpush1.msra.mxu0 0.0
    %352 = vmatprep.subr.mxu0 0.0
    %353 = vmatpush1.msra.mxu0 0.0
    %354 = vmatprep.subr.mxu0 0.0
    %355 = vmatpush1.msra.mxu0 0.0
    %356 = vmatprep.subr.mxu0 0.0
    %357 = vmatpush1.msra.mxu0 0.0
    %358 = vmatprep.subr.mxu0 0.0
    %359 = vmatpush1.msra.mxu0 0.0
    %360 = vmatprep.subr.mxu0 0.0
    %361 = vmatpush1.msra.mxu0 0.0
    %362 = vmatprep.subr.mxu0 0.0
    %363 = vmatpush1.msra.mxu0 0.0
    %364 = vmatprep.subr.mxu0 0.0
    %365 = vmatpush1.msra.mxu0 0.0
    %366 = vmatprep.subr.mxu0 0.0
    %367 = vmatpush1.msra.mxu0 0.0
    %368 = vmatprep.subr.mxu0 0.0
    %369 = vmatpush1.msra.mxu0 0.0
    %370 = vmatprep.subr.mxu0 0.0
    %371 = vmatpush1.msra.mxu0 0.0
    %372 = vmatprep.subr.mxu0 0.0
    %373 = vmatpush1.msra.mxu0 0.0
    %374 = vmatprep.subr.mxu0 0.0
    %375 = vmatpush1.msra.mxu0 0.0
    %376 = vmatprep.subr.mxu0 0.0
    %377 = vmatpush1.msra.mxu0 0.0
    %378 = vmatprep.subr.mxu0 0.0
    %379 = vmatpush1.msra.mxu0 0.0
    %380 = vmatprep.subr.mxu0 0.0
    %381 = vmatpush1.msra.mxu0 0.0
    %382 = vmatprep.subr.mxu0 0.0
    %383 = vmatpush1.msra.mxu0 0.0
    %384 = vmatprep.subr.mxu0 0.0
    %385 = vmatpush1.msra.mxu0 0.0
    %386 = vmatprep.mubr.f32.mxu0 0.0
    %v387 = vand.u32 %v54, 4294901760
    %v388 = vsub.f32 %v54, %v387
    %v389 = vand.u32 %v388, 4294901760
    %390 = vmatmul.mubr.f32.gmra.mrb[0].mxu0 %v389
    %v391 = vpop.f32.mrb[0].mxu0
    %v392 = vadd.f32 %v310, %v391
    %v393 = vpop.f32.mrb[0].mxu0
    %394 = vmatprep.mubr.f32.mxu0 0.0
    %v395 = vand.u32 %v57, 4294901760
    %v396 = vsub.f32 %v57, %v395
    %v397 = vand.u32 %v396, 4294901760
    %398 = vmatmul.mubr.f32.gmra.mrb[0].mxu0 %v397
    %v399 = vpop.f32.mrb[0].mxu0
    %v400 = vadd.f32 %v317, %v399
    %v401 = vpop.f32.mrb[0].mxu0
    %402 = vdwg.mxu0
    %403 = vmatprep.subr.mxu0 0.0
    %v404 = vand.u32 %v50, 4294901760
    %v405 = vsub.f32 %v50, %v404
    %v406 = vand.u32 %v405, 4294901760
    %407 = vmatpush1.msra.mxu0 %v406
    %408 = vmatprep.subr.mxu0 0.0
    %v409 = vand.u32 %v61, 4294901760
    %v410 = vsub.f32 %v61, %v409
    %v411 = vand.u32 %v410, 4294901760
    %412 = vmatpush1.msra.mxu0 %v411
    %413 = vmatprep.subr.mxu0 0.0
    %414 = vmatpush1.msra.mxu0 0.0
    %415 = vmatprep.subr.mxu0 0.0
    %416 = vmatpush1.msra.mxu0 0.0
    %417 = vmatprep.subr.mxu0 0.0
    %418 = vmatpush1.msra.mxu0 0.0
    %419 = vmatprep.subr.mxu0 0.0
    %420 = vmatpush1.msra.mxu0 0.0
    %421 = vmatprep.subr.mxu0 0.0
    %422 = vmatpush1.msra.mxu0 0.0
    %423 = vmatprep.subr.mxu0 0.0
    %424 = vmatpush1.msra.mxu0 0.0
    %425 = vmatprep.subr.mxu0 0.0
    %426 = vmatpush1.msra.mxu0 0.0
    %427 = vmatprep.subr.mxu0 0.0
    %428 = vmatpush1.msra.mxu0 0.0
    %429 = vmatprep.subr.mxu0 0.0
    %430 = vmatpush1.msra.mxu0 0.0
    %431 = vmatprep.subr.mxu0 0.0
    %432 = vmatpush1.msra.mxu0 0.0
    %433 = vmatprep.subr.mxu0 0.0
    %434 = vmatpush1.msra.mxu0 0.0
    %435 = vmatprep.subr.mxu0 0.0
    %436 = vmatpush1.msra.mxu0 0.0
    %437 = vmatprep.subr.mxu0 0.0
    %438 = vmatpush1.msra.mxu0 0.0
    %439 = vmatprep.subr.mxu0 0.0
    %440 = vmatpush1.msra.mxu0 0.0
    %441 = vmatprep.subr.mxu0 0.0
    %442 = vmatpush1.msra.mxu0 0.0
    %443 = vmatprep.subr.mxu0 0.0
    %444 = vmatpush1.msra.mxu0 0.0
    %445 = vmatprep.subr.mxu0 0.0
    %446 = vmatpush1.msra.mxu0 0.0
    %447 = vmatprep.subr.mxu0 0.0
    %448 = vmatpush1.msra.mxu0 0.0
    %449 = vmatprep.subr.mxu0 0.0
    %450 = vmatpush1.msra.mxu0 0.0
    %451 = vmatprep.subr.mxu0 0.0
    %452 = vmatpush1.msra.mxu0 0.0
    %453 = vmatprep.subr.mxu0 0.0
    %454 = vmatpush1.msra.mxu0 0.0
    %455 = vmatprep.subr.mxu0 0.0
    %456 = vmatpush1.msra.mxu0 0.0
    %457 = vmatprep.subr.mxu0 0.0
    %458 = vmatpush1.msra.mxu0 0.0
    %459 = vmatprep.subr.mxu0 0.0
    %460 = vmatpush1.msra.mxu0 0.0
    %461 = vmatprep.subr.mxu0 0.0
    %462 = vmatpush1.msra.mxu0 0.0
    %463 = vmatprep.subr.mxu0 0.0
    %464 = vmatpush1.msra.mxu0 0.0
    %465 = vmatprep.subr.mxu0 0.0
    %466 = vmatpush1.msra.mxu0 0.0
    %467 = vmatprep.subr.mxu0 0.0
    %468 = vmatpush1.msra.mxu0 0.0
    %469 = vmatprep.subr.mxu0 0.0
    %470 = vmatpush1.msra.mxu0 0.0
    %471 = vmatprep.subr.mxu0 0.0
    %472 = vmatpush1.msra.mxu0 0.0
    %473 = vmatprep.mubr.f32.mxu0 0.0
    %v474 = vand.u32 %v54, 4294901760
    %475 = vmatmul.mubr.f32.gmra.mrb[0].mxu0 %v474
    %v476 = vpop.f32.mrb[0].mxu0
    %v477 = vadd.f32 %v392, %v476
    %v478 = vpop.f32.mrb[0].mxu0
    %479 = vmatprep.mubr.f32.mxu0 0.0
    %v480 = vand.u32 %v57, 4294901760
    %481 = vmatmul.mubr.f32.gmra.mrb[0].mxu0 %v480
    %v482 = vpop.f32.mrb[0].mxu0
    %v483 = vadd.f32 %v400, %v482
    %v484 = vpop.f32.mrb[0].mxu0
    %485 = vdwg.mxu0
    %486 = vmatprep.subr.mxu0 0.0
    %v487 = vand.u32 %v50, 4294901760
    %488 = vmatpush1.msra.mxu0 %v487
    %489 = vmatprep.subr.mxu0 0.0
    %v490 = vand.u32 %v61, 4294901760
    %491 = vmatpush1.msra.mxu0 %v490
    %492 = vmatprep.subr.mxu0 0.0
    %493 = vmatpush1.msra.mxu0 0.0
    %494 = vmatprep.subr.mxu0 0.0
    %495 = vmatpush1.msra.mxu0 0.0
    %496 = vmatprep.subr.mxu0 0.0
    %497 = vmatpush1.msra.mxu0 0.0
    %498 = vmatprep.subr.mxu0 0.0
    %499 = vmatpush1.msra.mxu0 0.0
    %500 = vmatprep.subr.mxu0 0.0
    %501 = vmatpush1.msra.mxu0 0.0
    %502 = vmatprep.subr.mxu0 0.0
    %503 = vmatpush1.msra.mxu0 0.0
    %504 = vmatprep.subr.mxu0 0.0
    %505 = vmatpush1.msra.mxu0 0.0
    %506 = vmatprep.subr.mxu0 0.0
    %507 = vmatpush1.msra.mxu0 0.0
    %508 = vmatprep.subr.mxu0 0.0
    %509 = vmatpush1.msra.mxu0 0.0
    %510 = vmatprep.subr.mxu0 0.0
    %511 = vmatpush1.msra.mxu0 0.0
    %512 = vmatprep.subr.mxu0 0.0
    %513 = vmatpush1.msra.mxu0 0.0
    %514 = vmatprep.subr.mxu0 0.0
    %515 = vmatpush1.msra.mxu0 0.0
    %516 = vmatprep.subr.mxu0 0.0
    %517 = vmatpush1.msra.mxu0 0.0
    %518 = vmatprep.subr.mxu0 0.0
    %519 = vmatpush1.msra.mxu0 0.0
    %520 = vmatprep.subr.mxu0 0.0
    %521 = vmatpush1.msra.mxu0 0.0
    %522 = vmatprep.subr.mxu0 0.0
    %523 = vmatpush1.msra.mxu0 0.0
    %524 = vmatprep.subr.mxu0 0.0
    %525 = vmatpush1.msra.mxu0 0.0
    %526 = vmatprep.subr.mxu0 0.0
    %527 = vmatpush1.msra.mxu0 0.0
    %528 = vmatprep.subr.mxu0 0.0
    %529 = vmatpush1.msra.mxu0 0.0
    %530 = vmatprep.subr.mxu0 0.0
    %531 = vmatpush1.msra.mxu0 0.0
    %532 = vmatprep.subr.mxu0 0.0
    %533 = vmatpush1.msra.mxu0 0.0
    %534 = vmatprep.subr.mxu0 0.0
    %535 = vmatpush1.msra.mxu0 0.0
    %536 = vmatprep.subr.mxu0 0.0
    %537 = vmatpush1.msra.mxu0 0.0
    %538 = vmatprep.subr.mxu0 0.0
    %539 = vmatpush1.msra.mxu0 0.0
    %540 = vmatprep.subr.mxu0 0.0
    %541 = vmatpush1.msra.mxu0 0.0
    %542 = vmatprep.subr.mxu0 0.0
    %543 = vmatpush1.msra.mxu0 0.0
    %544 = vmatprep.subr.mxu0 0.0
    %545 = vmatpush1.msra.mxu0 0.0
    %546 = vmatprep.subr.mxu0 0.0
    %547 = vmatpush1.msra.mxu0 0.0
    %548 = vmatprep.subr.mxu0 0.0
    %549 = vmatpush1.msra.mxu0 0.0
    %550 = vmatprep.subr.mxu0 0.0
    %551 = vmatpush1.msra.mxu0 0.0
    %552 = vmatprep.mubr.f32.mxu0 0.0
    %v553 = vand.u32 %v54, 4294901760
    %554 = vmatmul.mubr.f32.gmra.mrb[0].mxu0 %v553
    %v555 = vpop.f32.mrb[0].mxu0
    %v556 = vadd.f32 %v477, %v555
    %v557 = vpop.f32.mrb[0].mxu0
    %558 = vmatprep.mubr.f32.mxu0 0.0
    %v559 = vand.u32 %v57, 4294901760
    %560 = vmatmul.mubr.f32.gmra.mrb[0].mxu0 %v559
    %v561 = vpop.f32.mrb[0].mxu0
    %v562 = vadd.f32 %v483, %v561
    %v563 = vpop.f32.mrb[0].mxu0
    %564 = vdwg.mxu0
    %vm565 = vcmask 261120
    %566 = vst.msk [vmem:[#allocation2] sm:$0xff] %vm565, %v556
    %567 = vst.msk [vmem:[#allocation2 + $0x8] sm:$0xff] %vm565, %v562
    // Predicated region
    $region10: #{tpu_custom_call.1} parent=1 // pred_check
      _
    $region11: #{tpu_custom_call.1} parent=1 // pred_check_branch
      %569 = sbr.rel (0) target = $region13
    $region12: #{tpu_custom_call.1} parent=1 // pred_region
      %s571 = ssub.s32 256, 256
      %572 = vsyncadd [#allocation3], %s571
      %s573 = sshll.u32 [#allocation2], 4
      %s574 = int_to_ptr.vmem [resolvable:$true] %s573
      %579 = dma.vmem_to_hbm [thread:$0]  %s574, 256, %s2, [#allocation3], 128, 128, 8
    $region13: #{tpu_custom_call.1} parent=1 // pred_fallthru
      _
    // Predicated region
    $region14: #{tpu_custom_call.1} parent=1 // pred_check
      _
    $region15: #{tpu_custom_call.1} parent=1 // pred_check_branch
      %581 = sbr.rel (0) target = $region17
    $region16: #{tpu_custom_call.1} parent=1 // pred_region
      %582 = dma.done [#allocation3], 256
    $region17: #{tpu_custom_call.1} parent=1 // pred_fallthru
      _
    %583 = vsyncpa [#allocation3], 1

</llo_original>
